<compile_context>
chip_gen: v7x
topology: tpu7x:2x2x1
jax: 0.10.0
libtpu: 0.0.40
codegen_flags: <defaults>
</compile_context>

<pallas_src>
import jax
import jax.numpy as jnp
from jax.experimental import pallas as pl
from jax.experimental.pallas import tpu as pltpu


def _round_up(x, m):
    return (x + m - 1) // m * m


def _choose_tile(dim, target, unit):
    """Pad `dim` only to the hardware minimum `unit`, then pick the largest tile
    <= target (a multiple of unit) whose tile-padding waste is <= ~6% of the dim.
    Returns (tile, padded_dim)."""
    d = _round_up(dim, unit)
    target = max(unit, (min(target, 4096) // unit) * unit)
    if d <= target:
        return d, d                      # single tile, padding only to hw minimum
    for t in range(target, unit - 1, -unit):
        padded = _round_up(d, t)
        if padded - d <= d // 16:
            return t, padded
    return unit, d                       # unreachable: t == unit has zero waste


def _linear_kernel_direct(x_ref, w_ref, b_ref, o_ref):
    """f32 output: accumulate straight into the resident output tile.

    Output block index is (i, j) for every k, so o_ref stays in VMEM across the
    whole reduction; bias is folded into the k==0 initialization."""
    k = pl.program_id(2)

    @pl.when(k == 0)
    def _():
        o_ref[...] = jnp.broadcast_to(b_ref[...], o_ref.shape)

    o_ref[...] += jnp.dot(
        x_ref[...], w_ref[...], preferred_element_type=jnp.float32
    )


def _linear_kernel_scratch(x_ref, w_ref, b_ref, o_ref, acc_ref):
    """Low-precision output: keep an f32 VMEM accumulator, single cast + store."""
    k = pl.program_id(2)

    @pl.when(k == 0)
    def _():
        acc_ref[...] = jnp.zeros_like(acc_ref)

    acc_ref[...] += jnp.dot(
        x_ref[...], w_ref[...], preferred_element_type=jnp.float32
    )

    @pl.when(k == pl.num_programs(2) - 1)
    def _():
        o_ref[...] = (acc_ref[...] + b_ref[...]).astype(o_ref.dtype)


def linear_forward(x, W, bias, *, tm=512, tn=512, tk=1024,
                   input_dtype=jnp.bfloat16):
    """Pallas equivalent of Linear.forward: x.mm(W) + bias (broadcast over rows).

    x:    (N, out_features)
    W:    (out_features, in_features)
    bias: (out_features,)   (requires in_features == out_features, exactly as the
                             PyTorch code implies via bias.expand_as(x.mm(W)))
    input_dtype: cast applied to x / W at the call boundary (default bf16 for
                 full MXU rate and half the HBM traffic); accumulation is f32.
                 Pass None to keep the caller's dtypes.
    returns (N, in_features) in x.dtype.
    """
    N, Fo = x.shape
    Fo2, Fi = W.shape
    assert Fo == Fo2, "x.mm(W) shape mismatch"
    assert bias.shape == (Fo,)
    assert Fi == Fo, "bias.expand_as(x @ W) requires in_features == out_features"
    # TODO(synk): no bias=False path — the PyTorch forward unconditionally uses self.bias.

    out_dtype = x.dtype
    in_dtype = jnp.dtype(input_dtype) if input_dtype is not None else jnp.dtype(x.dtype)
    isize = in_dtype.itemsize
    osize = jnp.dtype(out_dtype).itemsize

    # dtype-aware sublane multiple (8 rows f32, 16 bf16, 32 int8/fp8).
    sub = {4: 8, 2: 16, 1: 32}[min(isize, osize)]

    # Pad dims to hardware minimums only; shrink tiles to keep padding waste small.
    tm, Np = _choose_tile(N, tm, sub)     # rows
    tn, Fip = _choose_tile(Fi, tn, 128)   # output lanes
    tk, Fop = _choose_tile(Fo, tk, 128)   # reduction

    # Megacore: make sure there are >= 2 (i, j) tiles so both v7x TCs get work.
    if (Np // tm) * (Fip // tn) < 2:
        if tn % 256 == 0:
            tn //= 2
        elif tm % (2 * sub) == 0:
            tm //= 2

    x_p = x if (Np, Fop) == (N, Fo) else jnp.pad(x, ((0, Np - N), (0, Fop - Fo)))
    W_p = W if (Fop, Fip) == (Fo, Fi) else jnp.pad(W, ((0, Fop - Fo), (0, Fip - Fi)))
    b_p = bias if Fip == Fo else jnp.pad(bias, (0, Fip - Fo))
    b2d = b_p.reshape(1, Fip).astype(jnp.float32)   # 2D, broadcasts over rows in-kernel

    if input_dtype is not None:
        # no-op if already that dtype; accumulation remains f32 inside the kernel.
        x_p = x_p.astype(in_dtype)
        W_p = W_p.astype(in_dtype)

    grid = (Np // tm, Fip // tn, Fop // tk)

    # f32 outputs accumulate directly into the resident output tile (no scratch).
    direct = jnp.dtype(out_dtype) == jnp.dtype(jnp.float32)
    kernel = _linear_kernel_direct if direct else _linear_kernel_scratch
    scratch_shapes = [] if direct else [pltpu.VMEM((tm, tn), jnp.float32)]

    # Explicit VMEM budget: double-buffered x/W/bias tiles + output (+ acc scratch),
    # with headroom; capped at 64 MiB so the same config is v7x-safe.
    working_set = (2 * (tm * tk + tk * tn) * isize      # x, W double buffers
                   + 2 * tn * 4 * 2                     # bias double buffer
                   + 2 * tm * tn * osize                # output buffers
                   + (0 if direct else tm * tn * 4))    # f32 accumulator
    vmem_limit = min(max(working_set + (8 << 20), 32 << 20), 64 << 20)

    cost = pl.CostEstimate(
        flops=2 * Np * Fip * Fop,
        transcendentals=0,
        bytes_accessed=(Np * Fop * isize + Fop * Fip * isize
                        + Fip * 4 + Np * Fip * osize),
    )

    out = pl.pallas_call(
        kernel,
        out_shape=jax.ShapeDtypeStruct((Np, Fip), out_dtype),
        grid=grid,
        in_specs=[
            pl.BlockSpec((tm, tk), lambda i, j, k: (i, k)),   # x tile
            pl.BlockSpec((tk, tn), lambda i, j, k: (k, j)),   # W tile
            pl.BlockSpec((1, tn), lambda i, j, k: (0, j)),    # bias tile (per j only)
        ],
        out_specs=pl.BlockSpec((tm, tn), lambda i, j, k: (i, j)),
        scratch_shapes=scratch_shapes,
        compiler_params=pltpu.CompilerParams(
            dimension_semantics=("parallel", "parallel", "arbitrary"),
            vmem_limit_bytes=vmem_limit,
        ),
        cost_estimate=cost,
    )(x_p, W_p, b2d)

    if (Np, Fip) != (N, Fi):
        out = out[:N, :Fi]
    return out


if __name__ == "__main__":
    key = jax.random.PRNGKey(0)
    kx, kw, kb = jax.random.split(key, 3)

    # Case 1: default bf16-operand path (f32 accumulation, f32 output), aligned shapes.
    N, F = 256, 256
    x = jax.random.normal(kx, (N, F), dtype=jnp.float32)
    W = jax.random.normal(kw, (F, F), dtype=jnp.float32)   # torch.randn(out, in)
    b = jax.random.normal(kb, (F,), dtype=jnp.float32)     # torch.randn(out)

    out = jax.block_until_ready(linear_forward(x, W, b))
    ref = (x.astype(jnp.bfloat16).astype(jnp.float32)
           @ W.astype(jnp.bfloat16).astype(jnp.float32)) + b[None, :]
    assert out.shape == ref.shape
    assert jnp.allclose(out, ref, atol=1e-2, rtol=1e-2)

    # Case 2: f32 operands (input_dtype=None), non-tile-aligned shapes
    #         (exercises the hw-minimum padding + slicing + direct-accumulate path).
    N2, F2 = 200, 200
    x2 = jax.random.normal(kx, (N2, F2), dtype=jnp.float32)
    W2 = jax.random.normal(kw, (F2, F2), dtype=jnp.float32)
    b2 = jax.random.normal(kb, (F2,), dtype=jnp.float32)

    out2 = jax.block_until_ready(linear_forward(x2, W2, b2, input_dtype=None))
    ref2 = x2 @ W2 + b2[None, :]
    assert out2.shape == ref2.shape
    assert jnp.allclose(out2, ref2, atol=1e-3, rtol=1e-3)

    # Case 3: bf16 activations end-to-end (exercises the f32-scratch writeback path).
    N3, F3 = 64, 128
    x3 = jax.random.normal(kx, (N3, F3), dtype=jnp.float32).astype(jnp.bfloat16)
    W3 = jax.random.normal(kw, (F3, F3), dtype=jnp.float32).astype(jnp.bfloat16)
    b3 = jax.random.normal(kb, (F3,), dtype=jnp.float32)

    out3 = jax.block_until_ready(linear_forward(x3, W3, b3))
    ref3 = (x3.astype(jnp.float32) @ W3.astype(jnp.float32)) + b3[None, :]
    assert out3.shape == ref3.shape
    assert jnp.allclose(out3.astype(jnp.float32), ref3, atol=1e-1, rtol=5e-2)

    print("KERNEL_OK")
</pallas_src>

<mosaic_0001>
module attributes {stable_mosaic.version = 11 : i64} {
  func.func @_linear_kernel_direct(%arg0: i32, %arg1: i32, %arg2: i32, %arg3: memref<256x256xbf16, #tpu.memory_space<vmem>>, %arg4: memref<256x128xbf16, #tpu.memory_space<vmem>>, %arg5: memref<1x128xf32, #tpu.memory_space<vmem>>, %arg6: memref<256x128xf32, #tpu.memory_space<vmem>>) attributes {dimension_semantics = [#tpu.dimension_semantics<parallel>, #tpu.dimension_semantics<parallel>, #tpu.dimension_semantics<arbitrary>], iteration_bounds = array<i64: 1, 2, 1>, scalar_prefetch = 0 : i64, scratch_operands = 0 : i64, tpu.core_type = #tpu.core_type<tc>, window_params = [{transform_indices = @transform_0, window_bounds = array<i64: 256, 256>}, {transform_indices = @transform_1, window_bounds = array<i64: 256, 128>}, {transform_indices = @transform_2, window_bounds = array<i64: 1, 128>}, {transform_indices = @transform_3, window_bounds = array<i64: 256, 128>}]} {
    %c0_i32 = arith.constant 0 : i32
    %0 = arith.cmpi eq, %arg2, %c0_i32 : i32
    %1 = arith.extui %0 : i1 to i32
    %c0_i32_0 = arith.constant 0 : i32
    %2 = arith.cmpi ne, %1, %c0_i32_0 : i32
    scf.if %2 {
      %c0_8 = arith.constant 0 : index
      %c0_9 = arith.constant 0 : index
      %9 = vector.load %arg5[%c0_8, %c0_9] : memref<1x128xf32, #tpu.memory_space<vmem>>, vector<1x128xf32>
      %10 = vector.shape_cast %9 : vector<1x128xf32> to vector<1x128xf32>
      %11 = vector.broadcast %10 : vector<1x128xf32> to vector<256x128xf32>
      %c0_10 = arith.constant 0 : index
      %c0_11 = arith.constant 0 : index
      %12 = vector.load %arg6[%c0_10, %c0_11] : memref<256x128xf32, #tpu.memory_space<vmem>>, vector<256x128xf32>
      tpu.vector_store %arg6[%c0_10, %c0_11], %11 {strides = array<i32>} : memref<256x128xf32, #tpu.memory_space<vmem>>, vector<256x128xf32>,
    } else {
    }
    %c0 = arith.constant 0 : index
    %c0_1 = arith.constant 0 : index
    %3 = vector.load %arg6[%c0, %c0_1] : memref<256x128xf32, #tpu.memory_space<vmem>>, vector<256x128xf32>
    %c0_2 = arith.constant 0 : index
    %c0_3 = arith.constant 0 : index
    %4 = vector.load %arg3[%c0_2, %c0_3] : memref<256x256xbf16, #tpu.memory_space<vmem>>, vector<256x256xbf16>
    %c0_4 = arith.constant 0 : index
    %c0_5 = arith.constant 0 : index
    %5 = vector.load %arg4[%c0_4, %c0_5] : memref<256x128xbf16, #tpu.memory_space<vmem>>, vector<256x128xbf16>
    %cst = arith.constant dense<0.000000e+00> : vector<256x128xf32>
    %6 = tpu.matmul %4, %5, %cst {dimension_numbers = #tpu.dot_dimension_numbers<[1], [0], [0], [1], [0, 0, 1, 1], [], []>} : vector<256x256xbf16>, vector<256x128xbf16>, vector<256x128xf32> -> vector<256x128xf32>
    %7 = arith.addf %3, %6 : vector<256x128xf32>
    %c0_6 = arith.constant 0 : index
    %c0_7 = arith.constant 0 : index
    %8 = vector.load %arg6[%c0_6, %c0_7] : memref<256x128xf32, #tpu.memory_space<vmem>>, vector<256x128xf32>
    tpu.vector_store %arg6[%c0_6, %c0_7], %7 {strides = array<i32>} : memref<256x128xf32, #tpu.memory_space<vmem>>, vector<256x128xf32>,
    return
  }
  func.func @transform_0(%arg0: i32, %arg1: i32, %arg2: i32) -> (i32, i32) {
    %c0_i32 = arith.constant 0 : i32
    return %arg0, %arg2 : i32, i32
  }
  func.func @transform_1(%arg0: i32, %arg1: i32, %arg2: i32) -> (i32, i32) {
    %c0_i32 = arith.constant 0 : i32
    return %arg2, %arg1 : i32, i32
  }
  func.func @transform_2(%arg0: i32, %arg1: i32, %arg2: i32) -> (i32, i32) {
    %c0_i32 = arith.constant 0 : i32
    %c0_i32_0 = arith.constant 0 : i32
    return %c0_i32, %arg1 : i32, i32
  }
  func.func @transform_3(%arg0: i32, %arg1: i32, %arg2: i32) -> (i32, i32) {
    %c0_i32 = arith.constant 0 : i32
    return %arg0, %arg1 : i32, i32
  }
}

</mosaic_0001>

<llo_original>
// kernel: tpu_custom_call.1
$region0: #{tpu_custom_call.1}
  #allocation0 [shape = 'u32[]', space=smem, size = 0x4, offset = 0x4, fixed_abs, tag = 'smem constant byte address 0x4 - core index']
  #allocation1 [shape = 'u32[144,128]{1,0:T(1,128)}', space=vmem, size = 0x12000, scoped, tag = 'internal scratch']
  %s0 = inlined_call_operand.hbm [shape: bf16[256,256], index: 0, kind: input, shape index: {}]
  %s1 = inlined_call_operand.hbm [shape: bf16[256,256], index: 1, kind: input, shape index: {}]
  %s2 = inlined_call_operand.vmem [shape: f32[1,256], index: 2, kind: input, shape index: {}]
  %s3 = inlined_call_operand.hbm [shape: f32[256,256], index: 3, kind: output, shape index: {}]
  %s4 = sld [smem:[#allocation0]]
  $region57: #{tpu_custom_call.1} parent=0
    _
  %s6 = ssub.s32 1, %s4
  %s7 = scalar_select 0, %s6, %s4
  $region1: #{tpu_custom_call.1} parent=0
    #allocation2 [shape = 'u8[131072]{0}', space=vmem, size = 0x20000, scoped, tag = 'input window, operand 0, single buffered']
    #allocation3 [shape = 's32[2]{0}', space=sflag, size = 0x8, scoped, tag = 'scoped memory for tpu_custom_call.1']
    #allocation4 [shape = 's32[2]{0}', space=sflag, size = 0x8, scoped, tag = 'scoped memory for tpu_custom_call.1']
    #allocation5 [shape = 'u8[131072]{0}', space=vmem, size = 0x20000, scoped, tag = 'input window, operand 1']
    #allocation6 [shape = 's32[2]{0}', space=sflag, size = 0x8, scoped, tag = 'scoped memory for tpu_custom_call.1']
    #allocation7 [shape = 'u8[262144]{0}', space=vmem, size = 0x40000, scoped, tag = 'output window, operand 0']
    %8 = vsyncpa [#allocation3], 0
    %9 = vsyncpa [#allocation6], 0
    %s10 = scalar_lea.sflag [#allocation6], 1
    %11 = vsyncpa %s10, 0
    %12 = vsyncpa [#allocation4], 0
    %s13 = scalar_lea.sflag [#allocation4], 1
    %14 = vsyncpa %s13, 0
    loop: start=0, step=1, limit=4
    $region2: #{tpu_custom_call.1} parent=1 // loop_pre_header
      _
    $region3: #{tpu_custom_call.1} parent=1 // loop_header
      %s16 = sphi 0, %s20
      %p17 = scmp.ge.s32.totalorder %s16, 4
      %s23 = sphi 0, %s42
      %s24 = sphi 0, %s38
      %s25 = sphi 0, %s34
      %s26 = sphi 0, %s23
      %s27 = sphi 0, %s24
      %s28 = sphi 0, %s25
      %s29 = sphi 0, %s26
      %s30 = sphi 0, %s27
      %s31 = sphi 0, %s28
      %s47 = sphi 0, %s49
      %s50 = sphi 0, %s47
      %s51 = sphi 0, %s50
      %s67 = sphi 0, %s51
      %s75 = sphi 0, %s77
      %s78 = sphi 0, %s75
      %s79 = sphi 0, %s78
      %s95 = sphi 0, %s79
      %s101 = sphi 0, %s103
      %s104 = sphi 0, %s101
      %s105 = sphi 0, %s104
      %s121 = sphi 0, %s105
      %s129 = sphi 0, %s131
      %s132 = sphi 0, %s129
      %s133 = sphi 0, %s132
      %s149 = sphi 0, %s133
    $region4: #{tpu_custom_call.1} parent=1 // loop_header_branch
      %19 = sbr.rel (%p17) target = $region8
    $region5: #{tpu_custom_call.1} parent=1 // loop_body
      %s21 = ssub.s32 %s16, 1
      %s22 = ssub.s32 %s16, 2
      %s32 = sadd.s32 1, %s25
      %p33 = scmp.ge.s32.totalorder %s32, 1
      %s34 = scalar_select %p33, 0, %s32
      %s35 = sadd.s32 1, %s24
      %s36 = scalar_select %p33, %s35, %s24
      %p37 = scmp.ge.s32.totalorder %s36, 2
      %s38 = scalar_select %p37, 0, %s36
      %s39 = sadd.s32 1, %s23
      %s40 = scalar_select %p37, %s39, %s23
      %p41 = scmp.ge.s32.totalorder %s40, 1
      %s42 = scalar_select %p41, 0, %s40
      %s43 = ssub.s32 %s23, %s42
      %s44 = ssub.s32 %s25, %s34
      %s45 = sor.u32 %s43, %s44
      %p46 = scmp.eq.s32.totalorder %s45, 0
      %s48 = sadd.s32 %s47, 1
      %s49 = scalar_select %p46, %s47, %s48
      %p52 = pneg %p46
      %p53 = scmp.eq.s32.totalorder %s16, 1
      %p54 = por %p52, %p53
      %p55 = scmp.ne.s32.totalorder %s47, %s50
      %p56 = scmp.eq.s32.totalorder %s16, 0
      %p57 = por %p55, %p56
      %p58 = scmp.ne.s32.totalorder %s47, %s50
      %p59 = scmp.eq.s32.totalorder %s21, 1
      %p60 = por %p58, %p59
      %p61 = scmp.ne.s32.totalorder %s50, %s51
      %p62 = scmp.eq.s32.totalorder %s21, 0
      %p63 = por %p61, %p62
      %p64 = scmp.ne.s32.totalorder %s50, %s51
      %p65 = scmp.eq.s32.totalorder %s22, 1
      %p66 = por %p64, %p65
      %p68 = scmp.ne.s32.totalorder %s51, %s67
      %p69 = scmp.eq.s32.totalorder %s22, 0
      %p70 = por %p68, %p69
      %s71 = ssub.s32 %s25, %s34
      %s72 = ssub.s32 %s24, %s38
      %s73 = sor.u32 %s71, %s72
      %p74 = scmp.eq.s32.totalorder %s73, 0
      %s76 = sadd.s32 %s75, 1
      %s77 = scalar_select %p74, %s75, %s76
      %p80 = pneg %p74
      %p81 = scmp.eq.s32.totalorder %s16, 1
      %p82 = por %p80, %p81
      %p83 = scmp.ne.s32.totalorder %s75, %s78
      %p84 = scmp.eq.s32.totalorder %s16, 0
      %p85 = por %p83, %p84
      %p86 = scmp.ne.s32.totalorder %s75, %s78
      %p87 = scmp.eq.s32.totalorder %s21, 1
      %p88 = por %p86, %p87
      %p89 = scmp.ne.s32.totalorder %s78, %s79
      %p90 = scmp.eq.s32.totalorder %s21, 0
      %p91 = por %p89, %p90
      %p92 = scmp.ne.s32.totalorder %s78, %s79
      %p93 = scmp.eq.s32.totalorder %s22, 1
      %p94 = por %p92, %p93
      %p96 = scmp.ne.s32.totalorder %s79, %s95
      %p97 = scmp.eq.s32.totalorder %s22, 0
      %p98 = por %p96, %p97
      %s99 = ssub.s32 %s24, %s38
      %p100 = scmp.eq.s32.totalorder %s99, 0
      %s102 = sadd.s32 %s101, 1
      %s103 = scalar_select %p100, %s101, %s102
      %p106 = pneg %p100
      %p107 = scmp.eq.s32.totalorder %s16, 1
      %p108 = por %p106, %p107
      %p109 = scmp.ne.s32.totalorder %s101, %s104
      %p110 = scmp.eq.s32.totalorder %s16, 0
      %p111 = por %p109, %p110
      %p112 = scmp.ne.s32.totalorder %s101, %s104
      %p113 = scmp.eq.s32.totalorder %s21, 1
      %p114 = por %p112, %p113
      %p115 = scmp.ne.s32.totalorder %s104, %s105
      %p116 = scmp.eq.s32.totalorder %s21, 0
      %p117 = por %p115, %p116
      %p118 = scmp.ne.s32.totalorder %s104, %s105
      %p119 = scmp.eq.s32.totalorder %s22, 1
      %p120 = por %p118, %p119
      %p122 = scmp.ne.s32.totalorder %s105, %s121
      %p123 = scmp.eq.s32.totalorder %s22, 0
      %p124 = por %p122, %p123
      %s125 = ssub.s32 %s23, %s42
      %s126 = ssub.s32 %s24, %s38
      %s127 = sor.u32 %s125, %s126
      %p128 = scmp.eq.s32.totalorder %s127, 0
      %s130 = sadd.s32 %s129, 1
      %s131 = scalar_select %p128, %s129, %s130
      %p134 = pneg %p128
      %p135 = scmp.eq.s32.totalorder %s16, 1
      %p136 = por %p134, %p135
      %p137 = scmp.ne.s32.totalorder %s129, %s132
      %p138 = scmp.eq.s32.totalorder %s16, 0
      %p139 = por %p137, %p138
      %p140 = scmp.ne.s32.totalorder %s129, %s132
      %p141 = scmp.eq.s32.totalorder %s21, 1
      %p142 = por %p140, %p141
      %p143 = scmp.ne.s32.totalorder %s132, %s133
      %p144 = scmp.eq.s32.totalorder %s21, 0
      %p145 = por %p143, %p144
      %p146 = scmp.ne.s32.totalorder %s132, %s133
      %p147 = scmp.eq.s32.totalorder %s22, 1
      %p148 = por %p146, %p147
      %p150 = scmp.ne.s32.totalorder %s133, %s149
      %p151 = scmp.eq.s32.totalorder %s22, 0
      %p152 = por %p150, %p151
      %p153 = scmp.le.s32.totalorder 1, %s16
      %p154 = scmp.lt.s32.totalorder %s16, 3
      %p155 = pnand %p153, %p154
      %p156 = pneg %p155
      // Predicated region
      $region9: #{tpu_custom_call.1} parent=5 // pred_check
        _
      $region10: #{tpu_custom_call.1} parent=5 // pred_check_branch
        %158 = sbr.rel (%p155) target = $region12
      $region11: #{tpu_custom_call.1} parent=5 // pred_region
        %s159 = ssub.s32 %s16, 1
        // Predicated region
        $region13: #{tpu_custom_call.1} parent=11 // pred_check
          %p160 = pneg %p63
        $region14: #{tpu_custom_call.1} parent=11 // pred_check_branch
          %162 = sbr.rel (%p160) target = $region16
        $region15: #{tpu_custom_call.1} parent=11 // pred_region
          %s163 = smul.u32 32, %s26
          %s164 = smul.u32 2, %s28
          %s166 = ssub.s32 4096, 4096
          %167 = vsyncadd [#allocation3], %s166
          %s168 = smul.addr %s163, 2
          %s169 = sadd.s32 %s164, %s168
          %s170 = smul.addr %s169, 64
          %s171 = scalar_lea.hbm %s0, %s170
          %s172 = sshll.u32 [#allocation2], 4
          %s173 = int_to_ptr.vmem [resolvable:$true] %s172
          %178 = dma.hbm_to_vmem [thread:$0]  %s171, 4096, %s173, [#allocation3], 128, 128, 8
        $region16: #{tpu_custom_call.1} parent=11 // pred_fallthru
          _
      $region12: #{tpu_custom_call.1} parent=5 // pred_fallthru
        _
      %p179 = scmp.lt.s32.totalorder %s16, 2
      // Predicated region
      $region17: #{tpu_custom_call.1} parent=5 // pred_check
        %p180 = pneg %p179
      $region18: #{tpu_custom_call.1} parent=5 // pred_check_branch
        %182 = sbr.rel (%p180) target = $region20
      $region19: #{tpu_custom_call.1} parent=5 // pred_region
        // Predicated region
        $region21: #{tpu_custom_call.1} parent=19 // pred_check
          %p183 = pneg %p85
        $region22: #{tpu_custom_call.1} parent=19 // pred_check_branch
          %185 = sbr.rel (%p183) target = $region24
        $region23: #{tpu_custom_call.1} parent=19 // pred_region
          %s186 = sand.u32 %s75, 1
          %s187 = scalar_lea.sflag [#allocation6], %s186
          %s188 = sand.u32 %s75, 1
          %s189 = smul.addr %s188, 128
          %s190 = scalar_lea.vmem [#allocation5], %s189
          %s191 = smul.u32 32, %s25
          %s193 = ssub.s32 2048, 2048
          %194 = vsyncadd %s187, %s193
          %s195 = smul.addr %s191, 2
          %s196 = sadd.s32 %s24, %s195
          %s197 = smul.addr %s196, 64
          %s198 = scalar_lea.hbm %s1, %s197
          %s199 = sshll.u32 %s190, 4
          %s200 = int_to_ptr.vmem [resolvable:$true] %s199
          %205 = dma.hbm_to_vmem [thread:$0]  %s198, 2048, %s200, %s187, 128, 64, 4
        $region24: #{tpu_custom_call.1} parent=19 // pred_fallthru
          _
        // Predicated region
        $region25: #{tpu_custom_call.1} parent=19 // pred_check
          %p206 = pneg %p111
        $region26: #{tpu_custom_call.1} parent=19 // pred_check_branch
          %208 = sbr.rel (%p206) target = $region28
        $region27: #{tpu_custom_call.1} parent=19 // pred_region
          %p209 = scmp.lt.s32.totalorder %s24, 1
          %s210 = scalar_select %p209, %s24, 1
          %s211 = scalar_lea.vmem %s2, %s210
        $region28: #{tpu_custom_call.1} parent=19 // pred_fallthru
          _
      $region20: #{tpu_custom_call.1} parent=5 // pred_fallthru
        _
      %p212 = scmp.le.s32.totalorder 1, %s16
      %p213 = scmp.lt.s32.totalorder %s16, 3
      %p214 = pnand %p212, %p213
      %p215 = pneg %p214
      // Predicated region
      $region29: #{tpu_custom_call.1} parent=5 // pred_check
        _
      $region30: #{tpu_custom_call.1} parent=5 // pred_check_branch
        %217 = sbr.rel (%p214) target = $region32
      $region31: #{tpu_custom_call.1} parent=5 // pred_region
        %s218 = ssub.s32 %s16, 1
        // Predicated region
        $region33: #{tpu_custom_call.1} parent=31 // pred_check
          %p219 = pneg %p63
        $region34: #{tpu_custom_call.1} parent=31 // pred_check_branch
          %221 = sbr.rel (%p219) target = $region36
        $region35: #{tpu_custom_call.1} parent=31 // pred_region
          %222 = dma.done [#allocation3], 4096
        $region36: #{tpu_custom_call.1} parent=31 // pred_fallthru
          _
        %s223 = sand.u32 %s78, 1
        %s224 = scalar_lea.sflag [#allocation6], %s223
        %s225 = sand.u32 %s78, 1
        %s226 = smul.addr %s225, 128
        %s227 = scalar_lea.vmem [#allocation5], %s226
        // Predicated region
        $region37: #{tpu_custom_call.1} parent=31 // pred_check
          %p228 = pneg %p91
        $region38: #{tpu_custom_call.1} parent=31 // pred_check_branch
          %230 = sbr.rel (%p228) target = $region40
        $region39: #{tpu_custom_call.1} parent=31 // pred_region
          %231 = dma.done %s224, 2048
        $region40: #{tpu_custom_call.1} parent=31 // pred_fallthru
          _
        %p232 = pneg %p63
        %p233 = pneg %p60
        %s234 = sand.u32 %s78, 1
        %s235 = scalar_lea.sflag [#allocation6], %s234
        %s236 = sand.u32 %s78, 1
        %s237 = smul.addr %s236, 128
        %s238 = scalar_lea.vmem [#allocation5], %s237
        %p239 = pneg %p91
        %p240 = pneg %p88
        %p241 = scmp.lt.s32.totalorder %s27, 1
        %s242 = scalar_select %p241, %s27, 1
        %s243 = scalar_lea.vmem %s2, %s242
        %p244 = pneg %p117
        %p245 = pneg %p114
        %p246 = pneg %p145
        %p247 = pneg %p142
        %s248 = sand.u32 %s132, 1
        %s249 = scalar_lea.sflag [#allocation4], %s248
        %s250 = sand.u32 %s132, 1
        %s251 = smul.addr %s250, 256
        %s252 = scalar_lea.vmem [#allocation7], %s251
        %s253 = smul.u32 32, %s26
        %s254 = smul.u32 2, %s28
        %s255 = smul.u32 32, %s28
        %p256 = scmp.lt.s32.totalorder %s27, 1
        %s257 = scalar_select %p256, %s27, 1
        %s258 = scalar_lea.vmem %s2, %s257
        %s259 = smul.u32 32, %s26
        %p261 = scmp.eq.s32.totalorder %s28, 0
        // Predicated region
        $region41: #{tpu_custom_call.1} parent=31 // pred_check
          %p262 = pneg %p261
        $region42: #{tpu_custom_call.1} parent=31 // pred_check_branch
          %264 = sbr.rel (%p262) target = $region44
        $region43: #{tpu_custom_call.1} parent=31 // pred_region
          %v265 = vld [vmem:[%s258] sm:$0x1]
          %v267 = vlaneseq
          %v268 = vshrl.u32 %v267, 7
          %v269 = vsub.s32 0, %v268
          %v270 = vrot.slane %v265, %v269
          %272 = vst [vmem:[%s252] sm:$0xff] %v270
          %273 = vst [vmem:[%s252 + $0x8] sm:$0xff] %v270
          %274 = vst [vmem:[%s252 + $0x10] sm:$0xff] %v270
          %275 = vst [vmem:[%s252 + $0x18] sm:$0xff] %v270
          %276 = vst [vmem:[%s252 + $0x20] sm:$0xff] %v270
          %277 = vst [vmem:[%s252 + $0x28] sm:$0xff] %v270
          %278 = vst [vmem:[%s252 + $0x30] sm:$0xff] %v270
          %279 = vst [vmem:[%s252 + $0x38] sm:$0xff] %v270
          %280 = vst [vmem:[%s252 + $0x40] sm:$0xff] %v270
          %281 = vst [vmem:[%s252 + $0x48] sm:$0xff] %v270
          %282 = vst [vmem:[%s252 + $0x50] sm:$0xff] %v270
          %283 = vst [vmem:[%s252 + $0x58] sm:$0xff] %v270
          %284 = vst [vmem:[%s252 + $0x60] sm:$0xff] %v270
          %285 = vst [vmem:[%s252 + $0x68] sm:$0xff] %v270
          %286 = vst [vmem:[%s252 + $0x70] sm:$0xff] %v270
          %287 = vst [vmem:[%s252 + $0x78] sm:$0xff] %v270
          %288 = vst [vmem:[%s252 + $0x80] sm:$0xff] %v270
          %289 = vst [vmem:[%s252 + $0x88] sm:$0xff] %v270
          %290 = vst [vmem:[%s252 + $0x90] sm:$0xff] %v270
          %291 = vst [vmem:[%s252 + $0x98] sm:$0xff] %v270
          %292 = vst [vmem:[%s252 + $0xa0] sm:$0xff] %v270
          %293 = vst [vmem:[%s252 + $0xa8] sm:$0xff] %v270
          %294 = vst [vmem:[%s252 + $0xb0] sm:$0xff] %v270
          %295 = vst [vmem:[%s252 + $0xb8] sm:$0xff] %v270
          %296 = vst [vmem:[%s252 + $0xc0] sm:$0xff] %v270
          %297 = vst [vmem:[%s252 + $0xc8] sm:$0xff] %v270
          %298 = vst [vmem:[%s252 + $0xd0] sm:$0xff] %v270
          %299 = vst [vmem:[%s252 + $0xd8] sm:$0xff] %v270
          %300 = vst [vmem:[%s252 + $0xe0] sm:$0xff] %v270
          %301 = vst [vmem:[%s252 + $0xe8] sm:$0xff] %v270
          %302 = vst [vmem:[%s252 + $0xf0] sm:$0xff] %v270
          %303 = vst [vmem:[%s252 + $0xf8] sm:$0xff] %v270
        $region44: #{tpu_custom_call.1} parent=31 // pred_fallthru
          _
        %v304 = vld [vmem:[%s252] sm:$0xff]
        %v305 = vld [vmem:[%s252 + $0x8] sm:$0xff]
        %v306 = vld [vmem:[%s252 + $0x10] sm:$0xff]
        %v307 = vld [vmem:[%s252 + $0x18] sm:$0xff]
        %v308 = vld [vmem:[%s252 + $0x20] sm:$0xff]
        %v309 = vld [vmem:[%s252 + $0x28] sm:$0xff]
        %v310 = vld [vmem:[%s252 + $0x30] sm:$0xff]
        %v311 = vld [vmem:[%s252 + $0x38] sm:$0xff]
        %v312 = vld [vmem:[%s252 + $0x40] sm:$0xff]
        %v313 = vld [vmem:[%s252 + $0x48] sm:$0xff]
        %v314 = vld [vmem:[%s252 + $0x50] sm:$0xff]
        %v315 = vld [vmem:[%s252 + $0x58] sm:$0xff]
        %v316 = vld [vmem:[%s252 + $0x60] sm:$0xff]
        %v317 = vld [vmem:[%s252 + $0x68] sm:$0xff]
        %v318 = vld [vmem:[%s252 + $0x70] sm:$0xff]
        %v319 = vld [vmem:[%s252 + $0x78] sm:$0xff]
        %v320 = vld [vmem:[%s252 + $0x80] sm:$0xff]
        %v321 = vld [vmem:[%s252 + $0x88] sm:$0xff]
        %v322 = vld [vmem:[%s252 + $0x90] sm:$0xff]
        %v323 = vld [vmem:[%s252 + $0x98] sm:$0xff]
        %v324 = vld [vmem:[%s252 + $0xa0] sm:$0xff]
        %v325 = vld [vmem:[%s252 + $0xa8] sm:$0xff]
        %v326 = vld [vmem:[%s252 + $0xb0] sm:$0xff]
        %v327 = vld [vmem:[%s252 + $0xb8] sm:$0xff]
        %v328 = vld [vmem:[%s252 + $0xc0] sm:$0xff]
        %v329 = vld [vmem:[%s252 + $0xc8] sm:$0xff]
        %v330 = vld [vmem:[%s252 + $0xd0] sm:$0xff]
        %v331 = vld [vmem:[%s252 + $0xd8] sm:$0xff]
        %v332 = vld [vmem:[%s252 + $0xe0] sm:$0xff]
        %v333 = vld [vmem:[%s252 + $0xe8] sm:$0xff]
        %v334 = vld [vmem:[%s252 + $0xf0] sm:$0xff]
        %v335 = vld [vmem:[%s252 + $0xf8] sm:$0xff]
        %v336 = vld [vmem:[#allocation2] sm:$0xff]
        %v337 = vld [vmem:[#allocation2 + $0x8] sm:$0xff]
        %v338 = vld [vmem:[#allocation2 + $0x10] sm:$0xff]
        %v339 = vld [vmem:[#allocation2 + $0x18] sm:$0xff]
        %v340 = vld [vmem:[#allocation2 + $0x20] sm:$0xff]
        %v341 = vld [vmem:[#allocation2 + $0x28] sm:$0xff]
        %v342 = vld [vmem:[#allocation2 + $0x30] sm:$0xff]
        %v343 = vld [vmem:[#allocation2 + $0x38] sm:$0xff]
        %v344 = vld [vmem:[#allocation2 + $0x40] sm:$0xff]
        %v345 = vld [vmem:[#allocation2 + $0x48] sm:$0xff]
        %v346 = vld [vmem:[#allocation2 + $0x50] sm:$0xff]
        %v347 = vld [vmem:[#allocation2 + $0x58] sm:$0xff]
        %v348 = vld [vmem:[#allocation2 + $0x60] sm:$0xff]
        %v349 = vld [vmem:[#allocation2 + $0x68] sm:$0xff]
        %v350 = vld [vmem:[#allocation2 + $0x70] sm:$0xff]
        %v351 = vld [vmem:[#allocation2 + $0x78] sm:$0xff]
        %v352 = vld [vmem:[#allocation2 + $0x80] sm:$0xff]
        %v353 = vld [vmem:[#allocation2 + $0x88] sm:$0xff]
        %v354 = vld [vmem:[#allocation2 + $0x90] sm:$0xff]
        %v355 = vld [vmem:[#allocation2 + $0x98] sm:$0xff]
        %v356 = vld [vmem:[#allocation2 + $0xa0] sm:$0xff]
        %v357 = vld [vmem:[#allocation2 + $0xa8] sm:$0xff]
        %v358 = vld [vmem:[#allocation2 + $0xb0] sm:$0xff]
        %v359 = vld [vmem:[#allocation2 + $0xb8] sm:$0xff]
        %v360 = vld [vmem:[#allocation2 + $0xc0] sm:$0xff]
        %v361 = vld [vmem:[#allocation2 + $0xc8] sm:$0xff]
        %v362 = vld [vmem:[#allocation2 + $0xd0] sm:$0xff]
        %v363 = vld [vmem:[#allocation2 + $0xd8] sm:$0xff]
        %v364 = vld [vmem:[#allocation2 + $0xe0] sm:$0xff]
        %v365 = vld [vmem:[#allocation2 + $0xe8] sm:$0xff]
        %v366 = vld [vmem:[#allocation2 + $0xf0] sm:$0xff]
        %v367 = vld [vmem:[#allocation2 + $0xf8] sm:$0xff]
        %v368 = vld [vmem:[%s227] sm:$0xf]
        %v369 = vld [vmem:[%s227 + $0x4] sm:$0xf]
        %v370 = vld [vmem:[%s227 + $0x8] sm:$0xf]
        %v371 = vld [vmem:[%s227 + $0xc] sm:$0xf]
        %v372 = vld [vmem:[%s227 + $0x10] sm:$0xf]
        %v373 = vld [vmem:[%s227 + $0x14] sm:$0xf]
        %v374 = vld [vmem:[%s227 + $0x18] sm:$0xf]
        %v375 = vld [vmem:[%s227 + $0x1c] sm:$0xf]
        %v376 = vld [vmem:[%s227 + $0x20] sm:$0xf]
        %v377 = vld [vmem:[%s227 + $0x24] sm:$0xf]
        %v378 = vld [vmem:[%s227 + $0x28] sm:$0xf]
        %v379 = vld [vmem:[%s227 + $0x2c] sm:$0xf]
        %v380 = vld [vmem:[%s227 + $0x30] sm:$0xf]
        %v381 = vld [vmem:[%s227 + $0x34] sm:$0xf]
        %v382 = vld [vmem:[%s227 + $0x38] sm:$0xf]
        %v383 = vld [vmem:[%s227 + $0x3c] sm:$0xf]
        %v384 = vld [vmem:[%s227 + $0x40] sm:$0xf]
        %v385 = vld [vmem:[%s227 + $0x44] sm:$0xf]
        %v386 = vld [vmem:[%s227 + $0x48] sm:$0xf]
        %v387 = vld [vmem:[%s227 + $0x4c] sm:$0xf]
        %v388 = vld [vmem:[%s227 + $0x50] sm:$0xf]
        %v389 = vld [vmem:[%s227 + $0x54] sm:$0xf]
        %v390 = vld [vmem:[%s227 + $0x58] sm:$0xf]
        %v391 = vld [vmem:[%s227 + $0x5c] sm:$0xf]
        %v392 = vld [vmem:[%s227 + $0x60] sm:$0xf]
        %v393 = vld [vmem:[%s227 + $0x64] sm:$0xf]
        %v394 = vld [vmem:[%s227 + $0x68] sm:$0xf]
        %v395 = vld [vmem:[%s227 + $0x6c] sm:$0xf]
        %v396 = vld [vmem:[%s227 + $0x70] sm:$0xf]
        %v397 = vld [vmem:[%s227 + $0x74] sm:$0xf]
        %v398 = vld [vmem:[%s227 + $0x78] sm:$0xf]
        %v399 = vld [vmem:[%s227 + $0x7c] sm:$0xf]
        %v432 = vunpack.c.l.b16 %v336
        %v433 = vunpack.c.h.b16 %v336
        %v434 = vunpack.c.l.b16 %v337
        %v435 = vunpack.c.h.b16 %v337
        %v436 = vunpack.c.l.b16 %v338
        %v437 = vunpack.c.h.b16 %v338
        %v438 = vunpack.c.l.b16 %v339
        %v439 = vunpack.c.h.b16 %v339
        %v440 = vunpack.c.l.b16 %v340
        %v441 = vunpack.c.h.b16 %v340
        %v442 = vunpack.c.l.b16 %v341
        %v443 = vunpack.c.h.b16 %v341
        %v444 = vunpack.c.l.b16 %v342
        %v445 = vunpack.c.h.b16 %v342
        %v446 = vunpack.c.l.b16 %v343
        %v447 = vunpack.c.h.b16 %v343
        %v448 = vunpack.c.l.b16 %v344
        %v449 = vunpack.c.h.b16 %v344
        %v450 = vunpack.c.l.b16 %v345
        %v451 = vunpack.c.h.b16 %v345
        %v452 = vunpack.c.l.b16 %v346
        %v453 = vunpack.c.h.b16 %v346
        %v454 = vunpack.c.l.b16 %v347
        %v455 = vunpack.c.h.b16 %v347
        %v456 = vunpack.c.l.b16 %v348
        %v457 = vunpack.c.h.b16 %v348
        %v458 = vunpack.c.l.b16 %v349
        %v459 = vunpack.c.h.b16 %v349
        %v460 = vunpack.c.l.b16 %v350
        %v461 = vunpack.c.h.b16 %v350
        %v462 = vunpack.c.l.b16 %v351
        %v463 = vunpack.c.h.b16 %v351
        %v464 = vunpack.c.l.b16 %v352
        %v465 = vunpack.c.h.b16 %v352
        %v466 = vunpack.c.l.b16 %v353
        %v467 = vunpack.c.h.b16 %v353
        %v468 = vunpack.c.l.b16 %v354
        %v469 = vunpack.c.h.b16 %v354
        %v470 = vunpack.c.l.b16 %v355
        %v471 = vunpack.c.h.b16 %v355
        %v472 = vunpack.c.l.b16 %v356
        %v473 = vunpack.c.h.b16 %v356
        %v474 = vunpack.c.l.b16 %v357
        %v475 = vunpack.c.h.b16 %v357
        %v476 = vunpack.c.l.b16 %v358
        %v477 = vunpack.c.h.b16 %v358
        %v478 = vunpack.c.l.b16 %v359
        %v479 = vunpack.c.h.b16 %v359
        %v480 = vunpack.c.l.b16 %v360
        %v481 = vunpack.c.h.b16 %v360
        %v482 = vunpack.c.l.b16 %v361
        %v483 = vunpack.c.h.b16 %v361
        %v484 = vunpack.c.l.b16 %v362
        %v485 = vunpack.c.h.b16 %v362
        %v486 = vunpack.c.l.b16 %v363
        %v487 = vunpack.c.h.b16 %v363
        %v488 = vunpack.c.l.b16 %v364
        %v489 = vunpack.c.h.b16 %v364
        %v490 = vunpack.c.l.b16 %v365
        %v491 = vunpack.c.h.b16 %v365
        %v492 = vunpack.c.l.b16 %v366
        %v493 = vunpack.c.h.b16 %v366
        %v494 = vunpack.c.l.b16 %v367
        %v495 = vunpack.c.h.b16 %v367
        %v496 = vpack.c.b16 %v434, %v432
        %v497 = vpack.c.b16 %v435, %v433
        %v498 = vpack.c.b16 %v438, %v436
        %v499 = vpack.c.b16 %v439, %v437
        %v500 = vpack.c.b16 %v442, %v440
        %v501 = vpack.c.b16 %v443, %v441
        %v502 = vpack.c.b16 %v446, %v444
        %v503 = vpack.c.b16 %v447, %v445
        %v504 = vpack.c.b16 %v450, %v448
        %v505 = vpack.c.b16 %v451, %v449
        %v506 = vpack.c.b16 %v454, %v452
        %v507 = vpack.c.b16 %v455, %v453
        %v508 = vpack.c.b16 %v458, %v456
        %v509 = vpack.c.b16 %v459, %v457
        %v510 = vpack.c.b16 %v462, %v460
        %v511 = vpack.c.b16 %v463, %v461
        %v512 = vpack.c.b16 %v466, %v464
        %v513 = vpack.c.b16 %v467, %v465
        %v514 = vpack.c.b16 %v470, %v468
        %v515 = vpack.c.b16 %v471, %v469
        %v516 = vpack.c.b16 %v474, %v472
        %v517 = vpack.c.b16 %v475, %v473
        %v518 = vpack.c.b16 %v478, %v476
        %v519 = vpack.c.b16 %v479, %v477
        %v520 = vpack.c.b16 %v482, %v480
        %v521 = vpack.c.b16 %v483, %v481
        %v522 = vpack.c.b16 %v486, %v484
        %v523 = vpack.c.b16 %v487, %v485
        %v524 = vpack.c.b16 %v490, %v488
        %v525 = vpack.c.b16 %v491, %v489
        %v526 = vpack.c.b16 %v494, %v492
        %v527 = vpack.c.b16 %v495, %v493
        %v592 = vunpack.c.l.b16 %v368
        %v593 = vunpack.c.l.b16 %v369
        %v594 = vunpack.c.l.b16 %v370
        %v595 = vunpack.c.l.b16 %v371
        %v596 = vunpack.c.l.b16 %v372
        %v597 = vunpack.c.l.b16 %v373
        %v598 = vunpack.c.l.b16 %v374
        %v599 = vunpack.c.l.b16 %v375
        %v600 = vunpack.c.l.b16 %v376
        %v601 = vunpack.c.l.b16 %v377
        %v602 = vunpack.c.l.b16 %v378
        %v603 = vunpack.c.l.b16 %v379
        %v604 = vunpack.c.l.b16 %v380
        %v605 = vunpack.c.l.b16 %v381
        %v606 = vunpack.c.l.b16 %v382
        %v607 = vunpack.c.l.b16 %v383
        %v608 = vunpack.c.l.b16 %v384
        %v609 = vunpack.c.l.b16 %v385
        %v610 = vunpack.c.l.b16 %v386
        %v611 = vunpack.c.l.b16 %v387
        %v612 = vunpack.c.l.b16 %v388
        %v613 = vunpack.c.l.b16 %v389
        %v614 = vunpack.c.l.b16 %v390
        %v615 = vunpack.c.l.b16 %v391
        %v616 = vunpack.c.l.b16 %v392
        %v617 = vunpack.c.l.b16 %v393
        %v618 = vunpack.c.l.b16 %v394
        %v619 = vunpack.c.l.b16 %v395
        %v620 = vunpack.c.l.b16 %v396
        %v621 = vunpack.c.l.b16 %v397
        %v622 = vunpack.c.l.b16 %v398
        %v623 = vunpack.c.l.b16 %v399
        %v624 = vpack.c.b16 %v593, %v592
        %v625 = vpack.c.b16 %v595, %v594
        %v626 = vpack.c.b16 %v597, %v596
        %v627 = vpack.c.b16 %v599, %v598
        %v628 = vpack.c.b16 %v601, %v600
        %v629 = vpack.c.b16 %v603, %v602
        %v630 = vpack.c.b16 %v605, %v604
        %v631 = vpack.c.b16 %v607, %v606
        %v632 = vpack.c.b16 %v609, %v608
        %v633 = vpack.c.b16 %v611, %v610
        %v634 = vpack.c.b16 %v613, %v612
        %v635 = vpack.c.b16 %v615, %v614
        %v636 = vpack.c.b16 %v617, %v616
        %v637 = vpack.c.b16 %v619, %v618
        %v638 = vpack.c.b16 %v621, %v620
        %v639 = vpack.c.b16 %v623, %v622
        %656 = vmatprep.subr.bf16.mxu0 0
        %657 = vmatpush1.bf16.msra.mxu0 %v624
        %658 = vmatprep.subr.bf16.mxu0 0
        %659 = vmatpush1.bf16.msra.mxu0 %v625
        %660 = vmatprep.subr.bf16.mxu0 0
        %661 = vmatpush1.bf16.msra.mxu0 %v626
        %662 = vmatprep.subr.bf16.mxu0 0
        %663 = vmatpush1.bf16.msra.mxu0 %v627
        %664 = vmatprep.subr.bf16.mxu0 0
        %665 = vmatpush1.bf16.msra.mxu0 %v628
        %666 = vmatprep.subr.bf16.mxu0 0
        %667 = vmatpush1.bf16.msra.mxu0 %v629
        %668 = vmatprep.subr.bf16.mxu0 0
        %669 = vmatpush1.bf16.msra.mxu0 %v630
        %670 = vmatprep.subr.bf16.mxu0 0
        %671 = vmatpush1.bf16.msra.mxu0 %v631
        %672 = vmatprep.subr.bf16.mxu0 0
        %673 = vmatpush1.bf16.msra.mxu0 %v632
        %674 = vmatprep.subr.bf16.mxu0 0
        %675 = vmatpush1.bf16.msra.mxu0 %v633
        %676 = vmatprep.subr.bf16.mxu0 0
        %677 = vmatpush1.bf16.msra.mxu0 %v634
        %678 = vmatprep.subr.bf16.mxu0 0
        %679 = vmatpush1.bf16.msra.mxu0 %v635
        %680 = vmatprep.subr.bf16.mxu0 0
        %681 = vmatpush1.bf16.msra.mxu0 %v636
        %682 = vmatprep.subr.bf16.mxu0 0
        %683 = vmatpush1.bf16.msra.mxu0 %v637
        %684 = vmatprep.subr.bf16.mxu0 0
        %685 = vmatpush1.bf16.msra.mxu0 %v638
        %686 = vmatprep.subr.bf16.mxu0 0
        %687 = vmatpush1.bf16.msra.mxu0 %v639
        %688 = vmatprep.mubr.bf16.mxu0 %v497
        %689 = vmatmul.mubr.bf16.gmra.mrb[0].mxu0 %v496
        %v690 = vpop.f32.mrb[0].mxu0
        %v691 = vadd.f32 0.0, %v690
        %v692 = vpop.f32.mrb[0].mxu0
        %v693 = vpop.f32.mrb[0].mxu0
        %v694 = vadd.f32 0.0, %v693
        %v695 = vpop.f32.mrb[0].mxu0
        %696 = vmatprep.mubr.bf16.mxu0 %v499
        %697 = vmatmul.mubr.bf16.gmra.mrb[0].mxu0 %v498
        %v698 = vpop.f32.mrb[0].mxu0
        %v699 = vadd.f32 0.0, %v698
        %v700 = vpop.f32.mrb[0].mxu0
        %v701 = vpop.f32.mrb[0].mxu0
        %v702 = vadd.f32 0.0, %v701
        %v703 = vpop.f32.mrb[0].mxu0
        %704 = vmatprep.mubr.bf16.mxu0 %v501
        %705 = vmatmul.mubr.bf16.gmra.mrb[0].mxu0 %v500
        %v706 = vpop.f32.mrb[0].mxu0
        %v707 = vadd.f32 0.0, %v706
        %v708 = vpop.f32.mrb[0].mxu0
        %v709 = vpop.f32.mrb[0].mxu0
        %v710 = vadd.f32 0.0, %v709
        %v711 = vpop.f32.mrb[0].mxu0
        %712 = vmatprep.mubr.bf16.mxu0 %v503
        %713 = vmatmul.mubr.bf16.gmra.mrb[0].mxu0 %v502
        %v714 = vpop.f32.mrb[0].mxu0
        %v715 = vadd.f32 0.0, %v714
        %v716 = vpop.f32.mrb[0].mxu0
        %v717 = vpop.f32.mrb[0].mxu0
        %v718 = vadd.f32 0.0, %v717
        %v719 = vpop.f32.mrb[0].mxu0
        %720 = vmatprep.mubr.bf16.mxu0 %v505
        %721 = vmatmul.mubr.bf16.gmra.mrb[0].mxu0 %v504
        %v722 = vpop.f32.mrb[0].mxu0
        %v723 = vadd.f32 0.0, %v722
        %v724 = vpop.f32.mrb[0].mxu0
        %v725 = vpop.f32.mrb[0].mxu0
        %v726 = vadd.f32 0.0, %v725
        %v727 = vpop.f32.mrb[0].mxu0
        %728 = vmatprep.mubr.bf16.mxu0 %v507
        %729 = vmatmul.mubr.bf16.gmra.mrb[0].mxu0 %v506
        %v730 = vpop.f32.mrb[0].mxu0
        %v731 = vadd.f32 0.0, %v730
        %v732 = vpop.f32.mrb[0].mxu0
        %v733 = vpop.f32.mrb[0].mxu0
        %v734 = vadd.f32 0.0, %v733
        %v735 = vpop.f32.mrb[0].mxu0
        %736 = vmatprep.mubr.bf16.mxu0 %v509
        %737 = vmatmul.mubr.bf16.gmra.mrb[0].mxu0 %v508
        %v738 = vpop.f32.mrb[0].mxu0
        %v739 = vadd.f32 0.0, %v738
        %v740 = vpop.f32.mrb[0].mxu0
        %v741 = vpop.f32.mrb[0].mxu0
        %v742 = vadd.f32 0.0, %v741
        %v743 = vpop.f32.mrb[0].mxu0
        %744 = vmatprep.mubr.bf16.mxu0 %v511
        %745 = vmatmul.mubr.bf16.gmra.mrb[0].mxu0 %v510
        %v746 = vpop.f32.mrb[0].mxu0
        %v747 = vadd.f32 0.0, %v746
        %v748 = vpop.f32.mrb[0].mxu0
        %v749 = vpop.f32.mrb[0].mxu0
        %v750 = vadd.f32 0.0, %v749
        %v751 = vpop.f32.mrb[0].mxu0
        %752 = vmatprep.mubr.bf16.mxu0 %v513
        %753 = vmatmul.mubr.bf16.gmra.mrb[0].mxu0 %v512
        %v754 = vpop.f32.mrb[0].mxu0
        %v755 = vadd.f32 0.0, %v754
        %v756 = vpop.f32.mrb[0].mxu0
        %v757 = vpop.f32.mrb[0].mxu0
        %v758 = vadd.f32 0.0, %v757
        %v759 = vpop.f32.mrb[0].mxu0
        %760 = vmatprep.mubr.bf16.mxu0 %v515
        %761 = vmatmul.mubr.bf16.gmra.mrb[0].mxu0 %v514
        %v762 = vpop.f32.mrb[0].mxu0
        %v763 = vadd.f32 0.0, %v762
        %v764 = vpop.f32.mrb[0].mxu0
        %v765 = vpop.f32.mrb[0].mxu0
        %v766 = vadd.f32 0.0, %v765
        %v767 = vpop.f32.mrb[0].mxu0
        %768 = vmatprep.mubr.bf16.mxu0 %v517
        %769 = vmatmul.mubr.bf16.gmra.mrb[0].mxu0 %v516
        %v770 = vpop.f32.mrb[0].mxu0
        %v771 = vadd.f32 0.0, %v770
        %v772 = vpop.f32.mrb[0].mxu0
        %v773 = vpop.f32.mrb[0].mxu0
        %v774 = vadd.f32 0.0, %v773
        %v775 = vpop.f32.mrb[0].mxu0
        %776 = vmatprep.mubr.bf16.mxu0 %v519
        %777 = vmatmul.mubr.bf16.gmra.mrb[0].mxu0 %v518
        %v778 = vpop.f32.mrb[0].mxu0
        %v779 = vadd.f32 0.0, %v778
        %v780 = vpop.f32.mrb[0].mxu0
        %v781 = vpop.f32.mrb[0].mxu0
        %v782 = vadd.f32 0.0, %v781
        %v783 = vpop.f32.mrb[0].mxu0
        %784 = vmatprep.mubr.bf16.mxu0 %v521
        %785 = vmatmul.mubr.bf16.gmra.mrb[0].mxu0 %v520
        %v786 = vpop.f32.mrb[0].mxu0
        %v787 = vadd.f32 0.0, %v786
        %v788 = vpop.f32.mrb[0].mxu0
        %v789 = vpop.f32.mrb[0].mxu0
        %v790 = vadd.f32 0.0, %v789
        %v791 = vpop.f32.mrb[0].mxu0
        %792 = vmatprep.mubr.bf16.mxu0 %v523
        %793 = vmatmul.mubr.bf16.gmra.mrb[0].mxu0 %v522
        %v794 = vpop.f32.mrb[0].mxu0
        %v795 = vadd.f32 0.0, %v794
        %v796 = vpop.f32.mrb[0].mxu0
        %v797 = vpop.f32.mrb[0].mxu0
        %v798 = vadd.f32 0.0, %v797
        %v799 = vpop.f32.mrb[0].mxu0
        %800 = vmatprep.mubr.bf16.mxu0 %v525
        %801 = vmatmul.mubr.bf16.gmra.mrb[0].mxu0 %v524
        %v802 = vpop.f32.mrb[0].mxu0
        %v803 = vadd.f32 0.0, %v802
        %v804 = vpop.f32.mrb[0].mxu0
        %v805 = vpop.f32.mrb[0].mxu0
        %v806 = vadd.f32 0.0, %v805
        %v807 = vpop.f32.mrb[0].mxu0
        %808 = vmatprep.mubr.bf16.mxu0 %v527
        %809 = vmatmul.mubr.bf16.gmra.mrb[0].mxu0 %v526
        %v810 = vpop.f32.mrb[0].mxu0
        %v811 = vadd.f32 0.0, %v810
        %v812 = vpop.f32.mrb[0].mxu0
        %v813 = vpop.f32.mrb[0].mxu0
        %v814 = vadd.f32 0.0, %v813
        %v815 = vpop.f32.mrb[0].mxu0
        %816 = vdwg.mxu0
        %v817 = vadd.f32 %v304, %v691
        %v818 = vadd.f32 %v305, %v694
        %v819 = vadd.f32 %v306, %v699
        %v820 = vadd.f32 %v307, %v702
        %v821 = vadd.f32 %v308, %v707
        %v822 = vadd.f32 %v309, %v710
        %v823 = vadd.f32 %v310, %v715
        %v824 = vadd.f32 %v311, %v718
        %v825 = vadd.f32 %v312, %v723
        %v826 = vadd.f32 %v313, %v726
        %v827 = vadd.f32 %v314, %v731
        %v828 = vadd.f32 %v315, %v734
        %v829 = vadd.f32 %v316, %v739
        %v830 = vadd.f32 %v317, %v742
        %v831 = vadd.f32 %v318, %v747
        %v832 = vadd.f32 %v319, %v750
        %v833 = vadd.f32 %v320, %v755
        %v834 = vadd.f32 %v321, %v758
        %v835 = vadd.f32 %v322, %v763
        %v836 = vadd.f32 %v323, %v766
        %v837 = vadd.f32 %v324, %v771
        %v838 = vadd.f32 %v325, %v774
        %v839 = vadd.f32 %v326, %v779
        %v840 = vadd.f32 %v327, %v782
        %v841 = vadd.f32 %v328, %v787
        %v842 = vadd.f32 %v329, %v790
        %v843 = vadd.f32 %v330, %v795
        %v844 = vadd.f32 %v331, %v798
        %v845 = vadd.f32 %v332, %v803
        %v846 = vadd.f32 %v333, %v806
        %v847 = vadd.f32 %v334, %v811
        %v848 = vadd.f32 %v335, %v814
        %849 = vst [vmem:[%s252] sm:$0xff] %v817
        %850 = vst [vmem:[%s252 + $0x8] sm:$0xff] %v818
        %851 = vst [vmem:[%s252 + $0x10] sm:$0xff] %v819
        %852 = vst [vmem:[%s252 + $0x18] sm:$0xff] %v820
        %853 = vst [vmem:[%s252 + $0x20] sm:$0xff] %v821
        %854 = vst [vmem:[%s252 + $0x28] sm:$0xff] %v822
        %855 = vst [vmem:[%s252 + $0x30] sm:$0xff] %v823
        %856 = vst [vmem:[%s252 + $0x38] sm:$0xff] %v824
        %857 = vst [vmem:[%s252 + $0x40] sm:$0xff] %v825
        %858 = vst [vmem:[%s252 + $0x48] sm:$0xff] %v826
        %859 = vst [vmem:[%s252 + $0x50] sm:$0xff] %v827
        %860 = vst [vmem:[%s252 + $0x58] sm:$0xff] %v828
        %861 = vst [vmem:[%s252 + $0x60] sm:$0xff] %v829
        %862 = vst [vmem:[%s252 + $0x68] sm:$0xff] %v830
        %863 = vst [vmem:[%s252 + $0x70] sm:$0xff] %v831
        %864 = vst [vmem:[%s252 + $0x78] sm:$0xff] %v832
        %865 = vst [vmem:[%s252 + $0x80] sm:$0xff] %v833
        %866 = vst [vmem:[%s252 + $0x88] sm:$0xff] %v834
        %867 = vst [vmem:[%s252 + $0x90] sm:$0xff] %v835
        %868 = vst [vmem:[%s252 + $0x98] sm:$0xff] %v836
        %869 = vst [vmem:[%s252 + $0xa0] sm:$0xff] %v837
        %870 = vst [vmem:[%s252 + $0xa8] sm:$0xff] %v838
        %871 = vst [vmem:[%s252 + $0xb0] sm:$0xff] %v839
        %872 = vst [vmem:[%s252 + $0xb8] sm:$0xff] %v840
        %873 = vst [vmem:[%s252 + $0xc0] sm:$0xff] %v841
        %874 = vst [vmem:[%s252 + $0xc8] sm:$0xff] %v842
        %875 = vst [vmem:[%s252 + $0xd0] sm:$0xff] %v843
        %876 = vst [vmem:[%s252 + $0xd8] sm:$0xff] %v844
        %877 = vst [vmem:[%s252 + $0xe0] sm:$0xff] %v845
        %878 = vst [vmem:[%s252 + $0xe8] sm:$0xff] %v846
        %879 = vst [vmem:[%s252 + $0xf0] sm:$0xff] %v847
        %880 = vst [vmem:[%s252 + $0xf8] sm:$0xff] %v848
        %s881 = sand.u32 %s132, 1
        %s882 = scalar_lea.sflag [#allocation4], %s881
        %s883 = sand.u32 %s132, 1
        %s884 = smul.addr %s883, 256
        %s885 = scalar_lea.vmem [#allocation7], %s884
        // Predicated region
        $region45: #{tpu_custom_call.1} parent=31 // pred_check
          %p886 = pneg %p142
        $region46: #{tpu_custom_call.1} parent=31 // pred_check_branch
          %888 = sbr.rel (%p886) target = $region48
        $region47: #{tpu_custom_call.1} parent=31 // pred_region
          %s889 = smul.u32 32, %s26
          %s891 = ssub.s32 4096, 4096
          %892 = vsyncadd %s882, %s891
          %s893 = smul.addr %s889, 2
          %s894 = sadd.s32 %s27, %s893
          %s895 = smul.addr %s894, 128
          %s896 = scalar_lea.hbm %s3, %s895
          %s897 = sshll.u32 %s885, 4
          %s898 = int_to_ptr.vmem [resolvable:$true] %s897
          %903 = dma.vmem_to_hbm [thread:$0]  %s898, 4096, %s896, %s882, 128, 256, 8
        $region48: #{tpu_custom_call.1} parent=31 // pred_fallthru
          _
      $region32: #{tpu_custom_call.1} parent=5 // pred_fallthru
        _
      %p904 = scmp.le.s32.totalorder 2, %s16
      // Predicated region
      $region49: #{tpu_custom_call.1} parent=5 // pred_check
        %p905 = pneg %p904
      $region50: #{tpu_custom_call.1} parent=5 // pred_check_branch
        %907 = sbr.rel (%p905) target = $region52
      $region51: #{tpu_custom_call.1} parent=5 // pred_region
        %s908 = ssub.s32 %s16, 2
        // Predicated region
        $region53: #{tpu_custom_call.1} parent=51 // pred_check
          %p909 = pneg %p148
        $region54: #{tpu_custom_call.1} parent=51 // pred_check_branch
          %911 = sbr.rel (%p909) target = $region56
        $region55: #{tpu_custom_call.1} parent=51 // pred_region
          %s912 = sand.u32 %s133, 1
          %s913 = scalar_lea.sflag [#allocation4], %s912
          %s914 = sand.u32 %s133, 1
          %s915 = smul.addr %s914, 256
          %s916 = scalar_lea.vmem [#allocation7], %s915
          %917 = dma.done %s913, 4096
        $region56: #{tpu_custom_call.1} parent=51 // pred_fallthru
          _
      $region52: #{tpu_custom_call.1} parent=5 // pred_fallthru
        _
    $region6: #{tpu_custom_call.1} parent=1 // loop_footer
      %s20 = sadd.s32 1, %s16
    $region7: #{tpu_custom_call.1} parent=1 // loop_footer_branch
      %15 = sbr.rel target = $region3
    $region8: #{tpu_custom_call.1} parent=1 // loop_exit
      _
    %918 = vsyncpa [#allocation3], 1
    %s919 = scalar_lea.sflag [#allocation3], 1
    %920 = vsyncpa %s919, 1
    %921 = vsyncpa [#allocation6], 1
    %s922 = scalar_lea.sflag [#allocation6], 1
    %923 = vsyncpa %s922, 1
    %924 = vsyncpa [#allocation4], 1
    %s925 = scalar_lea.sflag [#allocation4], 1
    %926 = vsyncpa %s925, 1

</llo_original>
